<compile_context>
chip_gen: v7x
topology: tpu7x:2x2x1
jax: 0.10.0
libtpu: 0.0.40
codegen_flags: <defaults>
</compile_context>

<pallas_src>
import jax
import jax.numpy as jnp
from jax.experimental import pallas as pl
from jax.experimental.pallas import tpu as pltpu

EPS = 1e-5  # torch.nn.LayerNorm default eps


# --------------------------------------------------------------------------
# Feature detection / chip queries
# --------------------------------------------------------------------------
def _detect_single_buffer():
    """True iff pl.BlockSpec(pipeline_mode=pl.Buffered(1)) is available."""
    if not hasattr(pl, "Buffered"):
        return False
    try:
        pl.BlockSpec((8, 128), lambda i: (0, 0), pipeline_mode=pl.Buffered(1))
    except TypeError:
        return False
    return True


_HAS_SINGLE_BUFFER = _detect_single_buffer()


def _chip_vmem_budget():
    """Usable VMEM budget (bytes) for this chip, leaving compiler headroom.

    v5e/v6e: 128 MiB physical -> ~112 MiB budget; v7x: 64 MiB/TC -> ~56 MiB.
    """
    try:
        cap = int(pltpu.get_tpu_info().vmem_capacity_bytes)
    except Exception:
        # Trace-time query unavailable on this build: assume the smallest
        # capacity (v7x, 64 MiB/TC) so the residency decision stays safe.
        cap = 64 << 20
    return cap - max(8 << 20, cap // 8)


# --------------------------------------------------------------------------
# Kernel bodies
# --------------------------------------------------------------------------
def _layernorm(h, gamma, beta):
    """Two-pass LayerNorm over the last axis, all math in fp32."""
    inv_d = 1.0 / h.shape[-1]                       # compile-time constant
    mu = jnp.sum(h, axis=-1, keepdims=True) * inv_d
    c = h - mu
    var = jnp.sum(c * c, axis=-1, keepdims=True) * inv_d
    return c * (jax.lax.rsqrt(var + EPS) * gamma) + beta


def _resident_kernel(x_ref, w_ref, v_ref, o_ref):
    """Both weights resident in VMEM; one batch tile per grid step."""
    x = x_ref[...].astype(jnp.float32)              # (tb, D) fp32
    v = v_ref[...]                                  # (8, D): b1,g1,be1,b2,g2,be2,-,-

    h = jnp.dot(x.astype(jnp.bfloat16), w_ref[0],
                preferred_element_type=jnp.float32) + v[0:1]
    h = _layernorm(h, v[1:2], v[2:3])

    h = jnp.dot(h.astype(jnp.bfloat16), w_ref[1],
                preferred_element_type=jnp.float32) + v[3:4]
    h = _layernorm(h, v[4:5], v[5:6])

    o_ref[...] = (x + h).astype(o_ref.dtype)


def _streaming_kernel(x_ref, w_ref, v_ref, o_ref, acc_ref, h_ref):
    """Weight-streaming path: grid = (batch tile, phase, K slice).

    phase 0 accumulates x @ W1^T over K slices, then LayerNorm-1 into h_ref;
    phase 1 accumulates h @ W2^T, then LayerNorm-2 + residual into o_ref.
    """
    p = pl.program_id(1)
    k = pl.program_id(2)
    nk = pl.num_programs(2)
    tk = w_ref.shape[1]

    @pl.when((p == 0) & (k == 0))
    def _():
        # Stage the bf16 LHS for phase 0 (the input rows).
        h_ref[...] = x_ref[...].astype(jnp.bfloat16)

    @pl.when(k == 0)
    def _():
        acc_ref[...] = jnp.zeros_like(acc_ref)

    off = pl.multiple_of(k * tk, tk)
    acc_ref[...] += jnp.dot(h_ref[:, pl.ds(off, tk)], w_ref[0],
                            preferred_element_type=jnp.float32)

    @pl.when((p == 0) & (k == nk - 1))
    def _():
        v = v_ref[...]
        h = _layernorm(acc_ref[...] + v[0:1], v[1:2], v[2:3])
        h_ref[...] = h.astype(jnp.bfloat16)          # LHS for phase 1

    @pl.when((p == 1) & (k == nk - 1))
    def _():
        v = v_ref[...]
        h = _layernorm(acc_ref[...] + v[3:4], v[4:5], v[5:6])
        o_ref[...] = (x_ref[...].astype(jnp.float32) + h).astype(o_ref.dtype)


# --------------------------------------------------------------------------
# Tiling / VMEM sizing policy
# --------------------------------------------------------------------------
def _pick_tb(B, requested=None):
    """Batch tile: >=16 when possible, multiple of 8, prefer an even grid."""
    if requested is not None:
        assert B % requested == 0 and (requested % 8 == 0 or requested == B)
        return requested
    cands = (512, 256, 128, 64, 32, 16)
    for want_even in (True, False):
        for c in cands:
            if B % c == 0:
                steps = B // c
                if steps >= 2 and (steps % 2 == 0 or not want_even):
                    return c
    return B  # tiny batch: single grid step, full-extent block


def _resident_vmem_need(D, tb, cbuf):
    weights = 2 * D * D * 2 * cbuf          # stacked bf16 (2, D, D)
    consts = 8 * D * 4 * cbuf               # packed (8, D) fp32 vectors
    io = 2 * 2 * tb * D * 4                 # x + out tiles, double-buffered
    temps = 8 * tb * D * 4                  # fp32 LN / cast temporaries headroom
    return weights + consts + io + temps


def _streaming_vmem_need(D, tb, tk, cbuf):
    wblocks = 2 * tk * D * 2                # (1, tk, D) bf16, double-buffered
    consts = 8 * D * 4 * cbuf
    io = 2 * 2 * tb * D * 4                 # x + out tiles, double-buffered
    scratch = tb * D * 4 + tb * D * 2       # fp32 accumulator + bf16 LHS
    temps = 6 * tb * D * 4
    return wblocks + consts + io + scratch + temps


def _pick_streaming_tiles(B, D, budget, cbuf, requested_tb=None, requested_tk=None):
    if requested_tk is not None:
        assert D % requested_tk == 0 and requested_tk % 128 == 0
        tks = [requested_tk]
    else:
        tks = [t for t in (512, 256, 128) if D % t == 0]
    if not tks:
        raise ValueError(
            f"weight streaming needs D divisible by 128 (got D={D}) and the "
            "resident weights do not fit the VMEM budget for this shape")
    tb0 = _pick_tb(B, requested_tb)
    tb_cands = [tb0] + [t for t in (128, 64, 32, 16, 8) if t < tb0 and B % t == 0]
    for tb in tb_cands:
        for tk in tks:
            if _streaming_vmem_need(D, tb, tk, cbuf) <= budget:
                return tb, tk
    raise ValueError(
        f"no (tb, tk) tiling fits the VMEM budget ({budget} bytes) for B={B}, D={D}")


def _clamp_limit(need, budget):
    return max(min(int(need * 1.25) + (4 << 20), budget), min(16 << 20, budget))


def _const_spec(shape, n_grid_axes):
    zeros = (0,) * len(shape)
    idx = (lambda i: zeros) if n_grid_axes == 1 else (lambda i, p, k: zeros)
    if _HAS_SINGLE_BUFFER:
        return pl.BlockSpec(shape, idx, pipeline_mode=pl.Buffered(1))
    return pl.BlockSpec(shape, idx)


# --------------------------------------------------------------------------
# pallas_call builders
# --------------------------------------------------------------------------
def _build_resident_call(B, D, tb, out_dtype, vmem_limit):
    cost = pl.CostEstimate(
        flops=4 * B * D * D,
        bytes_accessed=2 * D * D * 2 + 8 * D * 4 + 2 * B * D * 4,
        transcendentals=2 * B,
    )
    return pl.pallas_call(
        _resident_kernel,
        out_shape=jax.ShapeDtypeStruct((B, D), out_dtype),
        grid_spec=pltpu.PrefetchScalarGridSpec(
            num_scalar_prefetch=0,
            grid=(B // tb,),
            in_specs=[
                pl.BlockSpec((tb, D), lambda i: (i, 0)),   # x (pipelined over batch)
                _const_spec((2, D, D), 1),                 # stacked W1^T / W2^T (bf16)
                _const_spec((8, D), 1),                    # packed bias/gamma/beta rows
            ],
            out_specs=pl.BlockSpec((tb, D), lambda i: (i, 0)),
        ),
        compiler_params=pltpu.CompilerParams(
            dimension_semantics=("parallel",),
            vmem_limit_bytes=vmem_limit,
        ),
        cost_estimate=cost,
    )


def _build_streaming_call(B, D, tb, tk, out_dtype, vmem_limit):
    cost = pl.CostEstimate(
        flops=4 * B * D * D,
        bytes_accessed=(B // tb) * 2 * D * D * 2 + 8 * D * 4 + 2 * B * D * 4,
        transcendentals=2 * B,
    )
    return pl.pallas_call(
        _streaming_kernel,
        out_shape=jax.ShapeDtypeStruct((B, D), out_dtype),
        grid_spec=pltpu.PrefetchScalarGridSpec(
            num_scalar_prefetch=0,
            grid=(B // tb, 2, D // tk),
            in_specs=[
                pl.BlockSpec((tb, D), lambda i, p, k: (i, 0)),        # x, resident per i
                pl.BlockSpec((1, tk, D), lambda i, p, k: (p, k, 0)),  # weight K-slice stream
                _const_spec((8, D), 3),                               # packed vectors
            ],
            out_specs=pl.BlockSpec((tb, D), lambda i, p, k: (i, 0)),
            scratch_shapes=[
                pltpu.VMEM((tb, D), jnp.float32),    # fp32 matmul accumulator
                pltpu.VMEM((tb, D), jnp.bfloat16),   # bf16 LHS (x, then LN(h1))
            ],
        ),
        compiler_params=pltpu.CompilerParams(
            dimension_semantics=("parallel", "arbitrary", "arbitrary"),
            vmem_limit_bytes=vmem_limit,
        ),
        cost_estimate=cost,
    )


# --------------------------------------------------------------------------
# Public wrapper / params / reference
# --------------------------------------------------------------------------
def residual_lin(x, params, *, tb=None, tk=None, force_streaming=False):
    """x: (B, D) fp32. params: dict from init_params (bf16 weights, fp32 rest)."""
    B, D = x.shape
    w, v = params["w"], params["v"]
    assert w.shape == (2, D, D) and v.shape == (8, D)

    budget = _chip_vmem_budget()
    cbuf = 1 if _HAS_SINGLE_BUFFER else 2

    tb_res = _pick_tb(B, tb)
    need_res = _resident_vmem_need(D, tb_res, cbuf)
    if not force_streaming and need_res <= budget:
        limit = _clamp_limit(need_res, budget)
        return _build_resident_call(B, D, tb_res, x.dtype, limit)(x, w, v)

    # Weight-streaming path (large D, e.g. D >= ~4k on v7x's 64 MiB/TC).
    tb_s, tk_s = _pick_streaming_tiles(B, D, budget, cbuf, tb, tk)
    limit = _clamp_limit(_streaming_vmem_need(D, tb_s, tk_s, cbuf), budget)
    return _build_streaming_call(B, D, tb_s, tk_s, x.dtype, limit)(x, w, v)


def init_params(key, dim):
    """nn.Linear / nn.LayerNorm parameter shapes & init ranges.

    Weights are stored pre-transposed and stacked as (2, dim, dim) bf16
    (w[0] = W1^T, w[1] = W2^T) so the kernel computes y = x @ W^T + b exactly
    like nn.Linear.  The six (dim,) vectors are packed into one (8, dim) fp32
    array: rows = [b1, gamma1, beta1, b2, gamma2, beta2, pad, pad].
    """
    k1, k2, k3, k4 = jax.random.split(key, 4)
    bound = 1.0 / float(dim) ** 0.5
    w1 = jax.random.uniform(k1, (dim, dim), jnp.float32, -bound, bound)
    b1 = jax.random.uniform(k2, (dim,), jnp.float32, -bound, bound)
    w2 = jax.random.uniform(k3, (dim, dim), jnp.float32, -bound, bound)
    b2 = jax.random.uniform(k4, (dim,), jnp.float32, -bound, bound)
    w = jnp.stack([w1.T, w2.T]).astype(jnp.bfloat16)
    v = jnp.zeros((8, dim), jnp.float32)
    v = v.at[0].set(b1)
    v = v.at[1].set(1.0)   # gamma1
    v = v.at[2].set(0.0)   # beta1
    v = v.at[3].set(b2)
    v = v.at[4].set(1.0)   # gamma2
    v = v.at[5].set(0.0)   # beta2
    return {"w": w, "v": v}


def reference(x, p):
    """Pure-JAX fp32 reference matching the PyTorch module semantics."""
    def ln(h, g, b):
        mu = jnp.mean(h, axis=-1, keepdims=True)
        var = jnp.mean((h - mu) ** 2, axis=-1, keepdims=True)
        return (h - mu) * jax.lax.rsqrt(var + EPS) * g + b

    w = p["w"].astype(jnp.float32)
    v = p["v"]
    h = ln(x @ w[0] + v[0], v[1], v[2])
    h = ln(h @ w[1] + v[3], v[4], v[5])
    return x + h


if __name__ == "__main__":
    key = jax.random.PRNGKey(0)
    kx1, kp1, kx2, kp2 = jax.random.split(key, 4)

    # 1) Resident-weight path: B=64, D=128 -> tb=32, grid=(2,) (even, pipelined).
    B, D = 64, 128
    x = jax.random.normal(kx1, (B, D), jnp.float32)
    params = init_params(kp1, D)
    out = jax.block_until_ready(residual_lin(x, params))
    ref = reference(x, params)
    assert out.shape == (B, D)
    err = float(jnp.max(jnp.abs(out - ref)))
    assert bool(jnp.allclose(out, ref, atol=5e-2, rtol=5e-2)), err

    # 2) Weight-streaming path (forced; auto-selected when resident weights
    #    would not fit the chip's VMEM budget, e.g. large D on v7x).
    #    B=32, D=256, tk=128 -> grid=(2, 2, 2): exercises K accumulation and
    #    the phase-0 -> phase-1 handoff through the bf16 scratch.
    B2, D2 = 32, 256
    x2 = jax.random.normal(kx2, (B2, D2), jnp.float32)
    params2 = init_params(kp2, D2)
    out2 = jax.block_until_ready(
        residual_lin(x2, params2, force_streaming=True, tk=128))
    ref2 = reference(x2, params2)
    assert out2.shape == (B2, D2)
    err2 = float(jnp.max(jnp.abs(out2 - ref2)))
    assert bool(jnp.allclose(out2, ref2, atol=5e-2, rtol=5e-2)), err2

    print("KERNEL_OK")
</pallas_src>

<mosaic_0001>
module attributes {stable_mosaic.version = 11 : i64} {
  func.func @_resident_kernel(%arg0: i32, %arg1: memref<32x128xf32, #tpu.memory_space<vmem>>, %arg2: memref<2x128x128xbf16, #tpu.memory_space<vmem>>, %arg3: memref<8x128xf32, #tpu.memory_space<vmem>>, %arg4: memref<32x128xf32, #tpu.memory_space<vmem>>) attributes {dimension_semantics = [#tpu.dimension_semantics<parallel>], iteration_bounds = array<i64: 2>, scalar_prefetch = 0 : i64, scratch_operands = 0 : i64, tpu.core_type = #tpu.core_type<tc>, window_params = [{transform_indices = @transform_0, window_bounds = array<i64: 32, 128>}, {pipeline_mode = #tpu.pipeline_mode<synchronous>, transform_indices = @transform_1, window_bounds = array<i64: 2, 128, 128>}, {pipeline_mode = #tpu.pipeline_mode<synchronous>, transform_indices = @transform_2, window_bounds = array<i64: 8, 128>}, {transform_indices = @transform_3, window_bounds = array<i64: 32, 128>}]} {
    %c0 = arith.constant 0 : index
    %c0_0 = arith.constant 0 : index
    %0 = vector.load %arg1[%c0, %c0_0] : memref<32x128xf32, #tpu.memory_space<vmem>>, vector<32x128xf32>
    %c0_1 = arith.constant 0 : index
    %c0_2 = arith.constant 0 : index
    %1 = vector.load %arg3[%c0_1, %c0_2] : memref<8x128xf32, #tpu.memory_space<vmem>>, vector<8x128xf32>
    %2 = arith.truncf %0 : vector<32x128xf32> to vector<32x128xbf16>
    %c0_3 = arith.constant 0 : index
    %c0_4 = arith.constant 0 : index
    %c0_5 = arith.constant 0 : index
    %3 = vector.load %arg2[%c0_3, %c0_4, %c0_5] : memref<2x128x128xbf16, #tpu.memory_space<vmem>>, vector<1x128x128xbf16>
    %4 = vector.shape_cast %3 : vector<1x128x128xbf16> to vector<128x128xbf16>
    %cst = arith.constant dense<0.000000e+00> : vector<32x128xf32>
    %5 = tpu.matmul %2, %4, %cst {dimension_numbers = #tpu.dot_dimension_numbers<[1], [0], [0], [1], [0, 0, 1, 1], [], []>} : vector<32x128xbf16>, vector<128x128xbf16>, vector<32x128xf32> -> vector<32x128xf32>
    %6 = vector.extract_strided_slice %1 {offsets = [0, 0], sizes = [1, 128], strides = [1, 1]} : vector<8x128xf32> to vector<1x128xf32>
    %7 = vector.broadcast %6 : vector<1x128xf32> to vector<32x128xf32>
    %8 = arith.addf %5, %7 : vector<32x128xf32>
    %9 = vector.extract_strided_slice %1 {offsets = [1, 0], sizes = [1, 128], strides = [1, 1]} : vector<8x128xf32> to vector<1x128xf32>
    %10 = vector.extract_strided_slice %1 {offsets = [2, 0], sizes = [1, 128], strides = [1, 1]} : vector<8x128xf32> to vector<1x128xf32>
    %cst_6 = arith.constant dense<0.000000e+00> : vector<32xf32>
    %11 = vector.multi_reduction <add>, %8, %cst_6 [1] : vector<32x128xf32> to vector<32xf32>
    %12 = vector.shape_cast %11 : vector<32xf32> to vector<32x1xf32>
    %cst_7 = arith.constant 7.812500e-03 : f32
    %13 = vector.broadcast %cst_7 : f32 to vector<32x1xf32>
    %14 = arith.mulf %12, %13 : vector<32x1xf32>
    %15 = vector.broadcast %14 : vector<32x1xf32> to vector<32x128xf32>
    %16 = arith.subf %8, %15 : vector<32x128xf32>
    %17 = arith.mulf %16, %16 : vector<32x128xf32>
    %cst_8 = arith.constant dense<0.000000e+00> : vector<32xf32>
    %18 = vector.multi_reduction <add>, %17, %cst_8 [1] : vector<32x128xf32> to vector<32xf32>
    %19 = vector.shape_cast %18 : vector<32xf32> to vector<32x1xf32>
    %cst_9 = arith.constant 7.812500e-03 : f32
    %20 = vector.broadcast %cst_9 : f32 to vector<32x1xf32>
    %21 = arith.mulf %19, %20 : vector<32x1xf32>
    %cst_10 = arith.constant 9.99999974E-6 : f32
    %22 = vector.broadcast %cst_10 : f32 to vector<32x1xf32>
    %23 = arith.addf %21, %22 : vector<32x1xf32>
    %24 = math.rsqrt %23 : vector<32x1xf32>
    %25 = vector.broadcast %24 : vector<32x1xf32> to vector<32x128xf32>
    %26 = vector.broadcast %9 : vector<1x128xf32> to vector<32x128xf32>
    %27 = arith.mulf %25, %26 : vector<32x128xf32>
    %28 = arith.mulf %16, %27 : vector<32x128xf32>
    %29 = vector.broadcast %10 : vector<1x128xf32> to vector<32x128xf32>
    %30 = arith.addf %28, %29 : vector<32x128xf32>
    %31 = arith.truncf %30 : vector<32x128xf32> to vector<32x128xbf16>
    %c1 = arith.constant 1 : index
    %c0_11 = arith.constant 0 : index
    %c0_12 = arith.constant 0 : index
    %32 = vector.load %arg2[%c1, %c0_11, %c0_12] : memref<2x128x128xbf16, #tpu.memory_space<vmem>>, vector<1x128x128xbf16>
    %33 = vector.shape_cast %32 : vector<1x128x128xbf16> to vector<128x128xbf16>
    %cst_13 = arith.constant dense<0.000000e+00> : vector<32x128xf32>
    %34 = tpu.matmul %31, %33, %cst_13 {dimension_numbers = #tpu.dot_dimension_numbers<[1], [0], [0], [1], [0, 0, 1, 1], [], []>} : vector<32x128xbf16>, vector<128x128xbf16>, vector<32x128xf32> -> vector<32x128xf32>
    %35 = vector.extract_strided_slice %1 {offsets = [3, 0], sizes = [1, 128], strides = [1, 1]} : vector<8x128xf32> to vector<1x128xf32>
    %36 = vector.broadcast %35 : vector<1x128xf32> to vector<32x128xf32>
    %37 = arith.addf %34, %36 : vector<32x128xf32>
    %38 = vector.extract_strided_slice %1 {offsets = [4, 0], sizes = [1, 128], strides = [1, 1]} : vector<8x128xf32> to vector<1x128xf32>
    %39 = vector.extract_strided_slice %1 {offsets = [5, 0], sizes = [1, 128], strides = [1, 1]} : vector<8x128xf32> to vector<1x128xf32>
    %cst_14 = arith.constant dense<0.000000e+00> : vector<32xf32>
    %40 = vector.multi_reduction <add>, %37, %cst_14 [1] : vector<32x128xf32> to vector<32xf32>
    %41 = vector.shape_cast %40 : vector<32xf32> to vector<32x1xf32>
    %cst_15 = arith.constant 7.812500e-03 : f32
    %42 = vector.broadcast %cst_15 : f32 to vector<32x1xf32>
    %43 = arith.mulf %41, %42 : vector<32x1xf32>
    %44 = vector.broadcast %43 : vector<32x1xf32> to vector<32x128xf32>
    %45 = arith.subf %37, %44 : vector<32x128xf32>
    %46 = arith.mulf %45, %45 : vector<32x128xf32>
    %cst_16 = arith.constant dense<0.000000e+00> : vector<32xf32>
    %47 = vector.multi_reduction <add>, %46, %cst_16 [1] : vector<32x128xf32> to vector<32xf32>
    %48 = vector.shape_cast %47 : vector<32xf32> to vector<32x1xf32>
    %cst_17 = arith.constant 7.812500e-03 : f32
    %49 = vector.broadcast %cst_17 : f32 to vector<32x1xf32>
    %50 = arith.mulf %48, %49 : vector<32x1xf32>
    %cst_18 = arith.constant 9.99999974E-6 : f32
    %51 = vector.broadcast %cst_18 : f32 to vector<32x1xf32>
    %52 = arith.addf %50, %51 : vector<32x1xf32>
    %53 = math.rsqrt %52 : vector<32x1xf32>
    %54 = vector.broadcast %53 : vector<32x1xf32> to vector<32x128xf32>
    %55 = vector.broadcast %38 : vector<1x128xf32> to vector<32x128xf32>
    %56 = arith.mulf %54, %55 : vector<32x128xf32>
    %57 = arith.mulf %45, %56 : vector<32x128xf32>
    %58 = vector.broadcast %39 : vector<1x128xf32> to vector<32x128xf32>
    %59 = arith.addf %57, %58 : vector<32x128xf32>
    %60 = arith.addf %0, %59 : vector<32x128xf32>
    %c0_19 = arith.constant 0 : index
    %c0_20 = arith.constant 0 : index
    %61 = vector.load %arg4[%c0_19, %c0_20] : memref<32x128xf32, #tpu.memory_space<vmem>>, vector<32x128xf32>
    tpu.vector_store %arg4[%c0_19, %c0_20], %60 {strides = array<i32>} : memref<32x128xf32, #tpu.memory_space<vmem>>, vector<32x128xf32>,
    return
  }
  func.func @transform_0(%arg0: i32) -> (i32, i32) {
    %c0_i32 = arith.constant 0 : i32
    %c0_i32_0 = arith.constant 0 : i32
    return %arg0, %c0_i32 : i32, i32
  }
  func.func @transform_1(%arg0: i32) -> (i32, i32, i32) {
    %c0_i32 = arith.constant 0 : i32
    %c0_i32_0 = arith.constant 0 : i32
    %c0_i32_1 = arith.constant 0 : i32
    %c0_i32_2 = arith.constant 0 : i32
    return %c0_i32, %c0_i32_0, %c0_i32_1 : i32, i32, i32
  }
  func.func @transform_2(%arg0: i32) -> (i32, i32) {
    %c0_i32 = arith.constant 0 : i32
    %c0_i32_0 = arith.constant 0 : i32
    %c0_i32_1 = arith.constant 0 : i32
    return %c0_i32, %c0_i32_0 : i32, i32
  }
  func.func @transform_3(%arg0: i32) -> (i32, i32) {
    %c0_i32 = arith.constant 0 : i32
    %c0_i32_0 = arith.constant 0 : i32
    return %arg0, %c0_i32 : i32, i32
  }
}

</mosaic_0001>

<llo_original>
// kernel: tpu_custom_call.1
$region0: #{tpu_custom_call.1}
  #allocation0 [shape = 'u32[]', space=smem, size = 0x4, offset = 0x4, fixed_abs, tag = 'smem constant byte address 0x4 - core index']
  #allocation1 [shape = 'u32[144,128]{1,0:T(1,128)}', space=vmem, size = 0x12000, scoped, tag = 'internal scratch']
  %s0 = inlined_call_operand.hbm [shape: f32[64,128], index: 0, kind: input, shape index: {}]
  %s1 = inlined_call_operand.hbm [shape: bf16[2,128,128], index: 1, kind: input, shape index: {}]
  %s2 = inlined_call_operand.hbm [shape: f32[8,128], index: 2, kind: input, shape index: {}]
  %s3 = inlined_call_operand.hbm [shape: f32[64,128], index: 3, kind: output, shape index: {}]
  %s4 = sld [smem:[#allocation0]]
  $region57: #{tpu_custom_call.1} parent=0
    _
  %s6 = ssub.s32 1, %s4
  %s7 = scalar_select 0, %s6, %s4
  $region1: #{tpu_custom_call.1} parent=0
    #allocation2 [shape = 'u8[32768]{0}', space=vmem, size = 0x8000, scoped, tag = 'input window, operand 0']
    #allocation3 [shape = 's32[2]{0}', space=sflag, size = 0x8, scoped, tag = 'scoped memory for tpu_custom_call.1']
    #allocation4 [shape = 's32[2]{0}', space=sflag, size = 0x8, scoped, tag = 'scoped memory for tpu_custom_call.1']
    #allocation5 [shape = 'u8[65536]{0}', space=vmem, size = 0x10000, scoped, tag = 'input window, operand 1, single buffered']
    #allocation6 [shape = 's32[1]{0}', space=sflag, size = 0x4, scoped, tag = 'scoped memory for tpu_custom_call.1']
    #allocation7 [shape = 'u8[4096]{0}', space=vmem, size = 0x1000, scoped, tag = 'input window, operand 2, single buffered']
    #allocation8 [shape = 'u8[32768]{0}', space=vmem, size = 0x8000, scoped, tag = 'output window, operand 0']
    %8 = vsyncpa [#allocation3], 0
    %s9 = scalar_lea.sflag [#allocation3], 1
    %10 = vsyncpa %s9, 0
    %11 = vsyncpa [#allocation6], 0
    %12 = vsyncpa [#allocation4], 0
    %s13 = scalar_lea.sflag [#allocation4], 1
    %14 = vsyncpa %s13, 0
    loop: start=0, step=1, limit=4
    $region2: #{tpu_custom_call.1} parent=1 // loop_pre_header
      _
    $region3: #{tpu_custom_call.1} parent=1 // loop_header
      %s16 = sphi 0, %s20
      %p17 = scmp.ge.s32.totalorder %s16, 4
      %s26 = sphi 0, %s28
      %s29 = sphi 0, %s26
      %s30 = sphi 0, %s29
      %s46 = sphi 0, %s30
      %s50 = sphi 0, %s50
      %s52 = sphi 0, %s50
      %s53 = sphi 0, %s52
      %s67 = sphi 0, %s53
      %s71 = sphi 0, %s71
      %s73 = sphi 0, %s71
      %s74 = sphi 0, %s73
      %s88 = sphi 0, %s74
      %s94 = sphi 0, %s96
      %s97 = sphi 0, %s94
      %s98 = sphi 0, %s97
      %s114 = sphi 0, %s98
    $region4: #{tpu_custom_call.1} parent=1 // loop_header_branch
      %19 = sbr.rel (%p17) target = $region8
    $region5: #{tpu_custom_call.1} parent=1 // loop_body
      %s21 = ssub.s32 %s16, 1
      %s22 = ssub.s32 %s16, 2
      %s23 = sadd.s32 %s16, 1
      %s24 = ssub.s32 %s16, %s23
      %p25 = scmp.eq.s32.totalorder %s24, 0
      %s27 = sadd.s32 %s26, 1
      %s28 = scalar_select %p25, %s26, %s27
      %p31 = pneg %p25
      %p32 = scmp.eq.s32.totalorder %s16, 1
      %p33 = por %p31, %p32
      %p34 = scmp.ne.s32.totalorder %s26, %s29
      %p35 = scmp.eq.s32.totalorder %s16, 0
      %p36 = por %p34, %p35
      %p37 = scmp.ne.s32.totalorder %s26, %s29
      %p38 = scmp.eq.s32.totalorder %s21, 1
      %p39 = por %p37, %p38
      %p40 = scmp.ne.s32.totalorder %s29, %s30
      %p41 = scmp.eq.s32.totalorder %s21, 0
      %p42 = por %p40, %p41
      %p43 = scmp.ne.s32.totalorder %s29, %s30
      %p44 = scmp.eq.s32.totalorder %s22, 1
      %p45 = por %p43, %p44
      %p47 = scmp.ne.s32.totalorder %s30, %s46
      %p48 = scmp.eq.s32.totalorder %s22, 0
      %p49 = por %p47, %p48
      %s51 = sadd.s32 %s50, 1
      %p54 = scmp.eq.s32.totalorder %s16, 1
      %p55 = scmp.ne.s32.totalorder %s50, %s52
      %p56 = scmp.eq.s32.totalorder %s16, 0
      %p57 = por %p55, %p56
      %p58 = scmp.ne.s32.totalorder %s50, %s52
      %p59 = scmp.eq.s32.totalorder %s21, 1
      %p60 = por %p58, %p59
      %p61 = scmp.ne.s32.totalorder %s52, %s53
      %p62 = scmp.eq.s32.totalorder %s21, 0
      %p63 = por %p61, %p62
      %p64 = scmp.ne.s32.totalorder %s52, %s53
      %p65 = scmp.eq.s32.totalorder %s22, 1
      %p66 = por %p64, %p65
      %p68 = scmp.ne.s32.totalorder %s53, %s67
      %p69 = scmp.eq.s32.totalorder %s22, 0
      %p70 = por %p68, %p69
      %s72 = sadd.s32 %s71, 1
      %p75 = scmp.eq.s32.totalorder %s16, 1
      %p76 = scmp.ne.s32.totalorder %s71, %s73
      %p77 = scmp.eq.s32.totalorder %s16, 0
      %p78 = por %p76, %p77
      %p79 = scmp.ne.s32.totalorder %s71, %s73
      %p80 = scmp.eq.s32.totalorder %s21, 1
      %p81 = por %p79, %p80
      %p82 = scmp.ne.s32.totalorder %s73, %s74
      %p83 = scmp.eq.s32.totalorder %s21, 0
      %p84 = por %p82, %p83
      %p85 = scmp.ne.s32.totalorder %s73, %s74
      %p86 = scmp.eq.s32.totalorder %s22, 1
      %p87 = por %p85, %p86
      %p89 = scmp.ne.s32.totalorder %s74, %s88
      %p90 = scmp.eq.s32.totalorder %s22, 0
      %p91 = por %p89, %p90
      %s92 = ssub.s32 %s16, %s23
      %p93 = scmp.eq.s32.totalorder %s92, 0
      %s95 = sadd.s32 %s94, 1
      %s96 = scalar_select %p93, %s94, %s95
      %p99 = pneg %p93
      %p100 = scmp.eq.s32.totalorder %s16, 1
      %p101 = por %p99, %p100
      %p102 = scmp.ne.s32.totalorder %s94, %s97
      %p103 = scmp.eq.s32.totalorder %s16, 0
      %p104 = por %p102, %p103
      %p105 = scmp.ne.s32.totalorder %s94, %s97
      %p106 = scmp.eq.s32.totalorder %s21, 1
      %p107 = por %p105, %p106
      %p108 = scmp.ne.s32.totalorder %s97, %s98
      %p109 = scmp.eq.s32.totalorder %s21, 0
      %p110 = por %p108, %p109
      %p111 = scmp.ne.s32.totalorder %s97, %s98
      %p112 = scmp.eq.s32.totalorder %s22, 1
      %p113 = por %p111, %p112
      %p115 = scmp.ne.s32.totalorder %s98, %s114
      %p116 = scmp.eq.s32.totalorder %s22, 0
      %p117 = por %p115, %p116
      %p118 = scmp.le.s32.totalorder 1, %s16
      %p119 = scmp.lt.s32.totalorder %s16, 3
      %p120 = pnand %p118, %p119
      %p121 = pneg %p120
      // Predicated region
      $region9: #{tpu_custom_call.1} parent=5 // pred_check
        _
      $region10: #{tpu_custom_call.1} parent=5 // pred_check_branch
        %123 = sbr.rel (%p120) target = $region12
      $region11: #{tpu_custom_call.1} parent=5 // pred_region
        %s124 = ssub.s32 %s16, 1
        // Predicated region
        $region13: #{tpu_custom_call.1} parent=11 // pred_check
          %p125 = pneg %p63
        $region14: #{tpu_custom_call.1} parent=11 // pred_check_branch
          %127 = sbr.rel (%p125) target = $region16
        $region15: #{tpu_custom_call.1} parent=11 // pred_region
          %s129 = ssub.s32 2048, 2048
          %130 = vsyncadd [#allocation6], %s129
          %s131 = sshll.u32 [#allocation5], 4
          %s132 = int_to_ptr.vmem [resolvable:$true] %s131
          %137 = dma.hbm_to_vmem [thread:$0]  %s1, 2048, %s132, [#allocation6], 64, 64, 4
        $region16: #{tpu_custom_call.1} parent=11 // pred_fallthru
          _
        // Predicated region
        $region17: #{tpu_custom_call.1} parent=11 // pred_check
          %p138 = pneg %p84
        $region18: #{tpu_custom_call.1} parent=11 // pred_check_branch
          %140 = sbr.rel (%p138) target = $region20
        $region19: #{tpu_custom_call.1} parent=11 // pred_region
          %s142 = ssub.s32 128, 128
          %143 = vsyncadd [#allocation6], %s142
          %s145 = sshll.u32 [#allocation7], 4
          %s146 = int_to_ptr.vmem [resolvable:$true] %s145
          %148 = dma.hbm_to_vmem [thread:$0]  %s2, 128, %s146, [#allocation6]
        $region20: #{tpu_custom_call.1} parent=11 // pred_fallthru
          _
      $region12: #{tpu_custom_call.1} parent=5 // pred_fallthru
        _
      %p149 = scmp.lt.s32.totalorder %s16, 2
      // Predicated region
      $region21: #{tpu_custom_call.1} parent=5 // pred_check
        %p150 = pneg %p149
      $region22: #{tpu_custom_call.1} parent=5 // pred_check_branch
        %152 = sbr.rel (%p150) target = $region24
      $region23: #{tpu_custom_call.1} parent=5 // pred_region
        // Predicated region
        $region25: #{tpu_custom_call.1} parent=23 // pred_check
          %p153 = pneg %p36
        $region26: #{tpu_custom_call.1} parent=23 // pred_check_branch
          %155 = sbr.rel (%p153) target = $region28
        $region27: #{tpu_custom_call.1} parent=23 // pred_region
          %s156 = sand.u32 %s26, 1
          %s157 = scalar_lea.sflag [#allocation3], %s156
          %s158 = sand.u32 %s26, 1
          %s159 = smul.addr %s158, 32
          %s160 = scalar_lea.vmem [#allocation2], %s159
          %s161 = smul.u32 4, %s16
          %s163 = ssub.s32 512, 512
          %164 = vsyncadd %s157, %s163
          %s165 = smul.addr %s161, 128
          %s166 = scalar_lea.hbm %s0, %s165
          %s167 = sshll.u32 %s160, 4
          %s168 = int_to_ptr.vmem [resolvable:$true] %s167
          %173 = dma.hbm_to_vmem [thread:$0]  %s166, 512, %s168, %s157, 128, 128, 8
        $region28: #{tpu_custom_call.1} parent=23 // pred_fallthru
          _
      $region24: #{tpu_custom_call.1} parent=5 // pred_fallthru
        _
      %p174 = scmp.le.s32.totalorder 1, %s16
      %p175 = scmp.lt.s32.totalorder %s16, 3
      %p176 = pnand %p174, %p175
      %p177 = pneg %p176
      // Predicated region
      $region29: #{tpu_custom_call.1} parent=5 // pred_check
        _
      $region30: #{tpu_custom_call.1} parent=5 // pred_check_branch
        %179 = sbr.rel (%p176) target = $region32
      $region31: #{tpu_custom_call.1} parent=5 // pred_region
        %s180 = ssub.s32 %s16, 1
        %s181 = sand.u32 %s29, 1
        %s182 = scalar_lea.sflag [#allocation3], %s181
        %s183 = sand.u32 %s29, 1
        %s184 = smul.addr %s183, 32
        %s185 = scalar_lea.vmem [#allocation2], %s184
        // Predicated region
        $region33: #{tpu_custom_call.1} parent=31 // pred_check
          %p186 = pneg %p42
        $region34: #{tpu_custom_call.1} parent=31 // pred_check_branch
          %188 = sbr.rel (%p186) target = $region36
        $region35: #{tpu_custom_call.1} parent=31 // pred_region
          %189 = dma.done %s182, 512
        $region36: #{tpu_custom_call.1} parent=31 // pred_fallthru
          _
        // Predicated region
        $region37: #{tpu_custom_call.1} parent=31 // pred_check
          %p190 = pneg %p63
        $region38: #{tpu_custom_call.1} parent=31 // pred_check_branch
          %192 = sbr.rel (%p190) target = $region40
        $region39: #{tpu_custom_call.1} parent=31 // pred_region
          %193 = dma.done [#allocation6], 2048
        $region40: #{tpu_custom_call.1} parent=31 // pred_fallthru
          _
        // Predicated region
        $region41: #{tpu_custom_call.1} parent=31 // pred_check
          %p194 = pneg %p84
        $region42: #{tpu_custom_call.1} parent=31 // pred_check_branch
          %196 = sbr.rel (%p194) target = $region44
        $region43: #{tpu_custom_call.1} parent=31 // pred_region
          %197 = dma.done [#allocation6], 128
        $region44: #{tpu_custom_call.1} parent=31 // pred_fallthru
          _
        %s198 = sand.u32 %s29, 1
        %s199 = scalar_lea.sflag [#allocation3], %s198
        %s200 = sand.u32 %s29, 1
        %s201 = smul.addr %s200, 32
        %s202 = scalar_lea.vmem [#allocation2], %s201
        %p203 = pneg %p42
        %p204 = pneg %p39
        %p205 = pneg %p63
        %p206 = pneg %p60
        %p207 = pneg %p84
        %p208 = pneg %p81
        %p209 = pneg %p110
        %p210 = pneg %p107
        %s211 = sand.u32 %s97, 1
        %s212 = scalar_lea.sflag [#allocation4], %s211
        %s213 = sand.u32 %s97, 1
        %s214 = smul.addr %s213, 32
        %s215 = scalar_lea.vmem [#allocation8], %s214
        %s216 = smul.u32 4, %s21
        %s217 = smul.u32 4, %s21
        %v219 = vld [vmem:[%s185] sm:$0xff]
        %v220 = vld [vmem:[%s185 + $0x8] sm:$0xff]
        %v221 = vld [vmem:[%s185 + $0x10] sm:$0xff]
        %v222 = vld [vmem:[%s185 + $0x18] sm:$0xff]
        %v223 = vld [vmem:[#allocation7] sm:$0xff]
        %v224 = vpack.c.bf16 %v220, %v219
        %v225 = vpack.c.bf16 %v222, %v221
        %v226 = vld [vmem:[#allocation5] sm:$0xf]
        %v227 = vld [vmem:[#allocation5 + $0x4] sm:$0xf]
        %v228 = vld [vmem:[#allocation5 + $0x8] sm:$0xf]
        %v229 = vld [vmem:[#allocation5 + $0xc] sm:$0xf]
        %v230 = vld [vmem:[#allocation5 + $0x10] sm:$0xf]
        %v231 = vld [vmem:[#allocation5 + $0x14] sm:$0xf]
        %v232 = vld [vmem:[#allocation5 + $0x18] sm:$0xf]
        %v233 = vld [vmem:[#allocation5 + $0x1c] sm:$0xf]
        %v234 = vld [vmem:[#allocation5 + $0x20] sm:$0xf]
        %v235 = vld [vmem:[#allocation5 + $0x24] sm:$0xf]
        %v236 = vld [vmem:[#allocation5 + $0x28] sm:$0xf]
        %v237 = vld [vmem:[#allocation5 + $0x2c] sm:$0xf]
        %v238 = vld [vmem:[#allocation5 + $0x30] sm:$0xf]
        %v239 = vld [vmem:[#allocation5 + $0x34] sm:$0xf]
        %v240 = vld [vmem:[#allocation5 + $0x38] sm:$0xf]
        %v241 = vld [vmem:[#allocation5 + $0x3c] sm:$0xf]
        %v242 = vlaneseq
        %v243 = vshrl.u32 %v242, 7
        %v244 = vsub.s32 0, %v243
        %v245 = vrot.slane %v223, %v244
        %v262 = vunpack.c.l.b16 %v226
        %v263 = vunpack.c.l.b16 %v227
        %v264 = vunpack.c.l.b16 %v228
        %v265 = vunpack.c.l.b16 %v229
        %v266 = vunpack.c.l.b16 %v230
        %v267 = vunpack.c.l.b16 %v231
        %v268 = vunpack.c.l.b16 %v232
        %v269 = vunpack.c.l.b16 %v233
        %v270 = vunpack.c.l.b16 %v234
        %v271 = vunpack.c.l.b16 %v235
        %v272 = vunpack.c.l.b16 %v236
        %v273 = vunpack.c.l.b16 %v237
        %v274 = vunpack.c.l.b16 %v238
        %v275 = vunpack.c.l.b16 %v239
        %v276 = vunpack.c.l.b16 %v240
        %v277 = vunpack.c.l.b16 %v241
        %v278 = vpack.c.b16 %v263, %v262
        %v279 = vpack.c.b16 %v265, %v264
        %v280 = vpack.c.b16 %v267, %v266
        %v281 = vpack.c.b16 %v269, %v268
        %v282 = vpack.c.b16 %v271, %v270
        %v283 = vpack.c.b16 %v273, %v272
        %v284 = vpack.c.b16 %v275, %v274
        %v285 = vpack.c.b16 %v277, %v276
        %294 = vmatprep.subr.bf16.mxu0 0
        %295 = vmatpush1.bf16.msra.mxu0 %v278
        %296 = vmatprep.subr.bf16.mxu0 0
        %297 = vmatpush1.bf16.msra.mxu0 %v279
        %298 = vmatprep.subr.bf16.mxu0 0
        %299 = vmatpush1.bf16.msra.mxu0 %v280
        %300 = vmatprep.subr.bf16.mxu0 0
        %301 = vmatpush1.bf16.msra.mxu0 %v281
        %302 = vmatprep.subr.bf16.mxu0 0
        %303 = vmatpush1.bf16.msra.mxu0 %v282
        %304 = vmatprep.subr.bf16.mxu0 0
        %305 = vmatpush1.bf16.msra.mxu0 %v283
        %306 = vmatprep.subr.bf16.mxu0 0
        %307 = vmatpush1.bf16.msra.mxu0 %v284
        %308 = vmatprep.subr.bf16.mxu0 0
        %309 = vmatpush1.bf16.msra.mxu0 %v285
        %310 = vmatprep.subr.bf16.mxu0 0
        %311 = vmatpush1.bf16.msra.mxu0 0
        %312 = vmatprep.subr.bf16.mxu0 0
        %313 = vmatpush1.bf16.msra.mxu0 0
        %314 = vmatprep.subr.bf16.mxu0 0
        %315 = vmatpush1.bf16.msra.mxu0 0
        %316 = vmatprep.subr.bf16.mxu0 0
        %317 = vmatpush1.bf16.msra.mxu0 0
        %318 = vmatprep.subr.bf16.mxu0 0
        %319 = vmatpush1.bf16.msra.mxu0 0
        %320 = vmatprep.subr.bf16.mxu0 0
        %321 = vmatpush1.bf16.msra.mxu0 0
        %322 = vmatprep.subr.bf16.mxu0 0
        %323 = vmatpush1.bf16.msra.mxu0 0
        %324 = vmatprep.subr.bf16.mxu0 0
        %325 = vmatpush1.bf16.msra.mxu0 0
        %326 = vmatprep.mubr.bf16.mxu0 0
        %327 = vmatmul.mubr.bf16.gmra.mrb[0].mxu0 %v224
        %v328 = vpop.f32.mrb[0].mxu0
        %v329 = vadd.f32 %v245, %v328
        %v330 = vpop.f32.mrb[0].mxu0
        %v331 = vpop.f32.mrb[0].mxu0
        %v332 = vadd.f32 %v245, %v331
        %v333 = vpop.f32.mrb[0].mxu0
        %334 = vmatprep.mubr.bf16.mxu0 0
        %335 = vmatmul.mubr.bf16.gmra.mrb[0].mxu0 %v225
        %v336 = vpop.f32.mrb[0].mxu0
        %v337 = vadd.f32 %v245, %v336
        %v338 = vpop.f32.mrb[0].mxu0
        %v339 = vpop.f32.mrb[0].mxu0
        %v340 = vadd.f32 %v245, %v339
        %v341 = vpop.f32.mrb[0].mxu0
        %342 = vdwg.mxu0
        %343 = vadd.xlane.f32.xlu0 %v329
        %v344 = vpop.xlane.xlu0 %343
        %345 = vadd.xlane.f32.xlu0 %v332
        %v346 = vpop.xlane.xlu0 %345
        %347 = vadd.xlane.f32.xlu0 %v337
        %v348 = vpop.xlane.xlu0 %347
        %349 = vadd.xlane.f32.xlu0 %v340
        %v350 = vpop.xlane.xlu0 %349
        %v351 = vmul.f32 %v344, 0.0078125
        %v352 = vmul.f32 %v346, 0.0078125
        %v353 = vmul.f32 %v348, 0.0078125
        %v354 = vmul.f32 %v350, 0.0078125
        %v355 = vsub.f32 %v329, %v351
        %v356 = vsub.f32 %v332, %v352
        %v357 = vsub.f32 %v337, %v353
        %v358 = vsub.f32 %v340, %v354
        %v359 = vmul.f32 %v355, %v355
        %v360 = vmul.f32 %v356, %v356
        %v361 = vmul.f32 %v357, %v357
        %v362 = vmul.f32 %v358, %v358
        %363 = vadd.xlane.f32.xlu0 %v359
        %v364 = vpop.xlane.xlu0 %363
        %365 = vadd.xlane.f32.xlu0 %v360
        %v366 = vpop.xlane.xlu0 %365
        %367 = vadd.xlane.f32.xlu0 %v361
        %v368 = vpop.xlane.xlu0 %367
        %369 = vadd.xlane.f32.xlu0 %v362
        %v370 = vpop.xlane.xlu0 %369
        %v371 = vmul.f32 %v364, 0.0078125
        %v372 = vmul.f32 %v366, 0.0078125
        %v373 = vmul.f32 %v368, 0.0078125
        %v374 = vmul.f32 %v370, 0.0078125
        %v375 = vadd.f32 %v371, 1e-05
        %v376 = vadd.f32 %v372, 1e-05
        %v377 = vadd.f32 %v373, 1e-05
        %v378 = vadd.f32 %v374, 1e-05
        %v379 = vrsqrt.pop %v375
        %v380 = vrsqrt.pop %v376
        %v381 = vrsqrt.pop %v377
        %v382 = vrsqrt.pop %v378
        %v383 = vlaneseq
        %v384 = vshrl.u32 %v383, 7
        %v385 = vsub.s32 1, %v384
        %v386 = vrot.slane %v223, %v385
        %v387 = vmul.f32 %v379, %v386
        %v388 = vmul.f32 %v380, %v386
        %v389 = vmul.f32 %v381, %v386
        %v390 = vmul.f32 %v382, %v386
        %v391 = vmul.f32 %v355, %v387
        %v392 = vmul.f32 %v356, %v388
        %v393 = vmul.f32 %v357, %v389
        %v394 = vmul.f32 %v358, %v390
        %v395 = vlaneseq
        %v396 = vshrl.u32 %v395, 7
        %v397 = vsub.s32 2, %v396
        %v398 = vrot.slane %v223, %v397
        %v399 = vadd.f32 %v391, %v398
        %v400 = vadd.f32 %v392, %v398
        %v401 = vadd.f32 %v393, %v398
        %v402 = vadd.f32 %v394, %v398
        %v403 = vpack.c.bf16 %v400, %v399
        %v404 = vpack.c.bf16 %v402, %v401
        %s405 = scalar_lea.vmem [#allocation5], 64
        %v406 = vld [vmem:[%s405] sm:$0xf]
        %v407 = vld [vmem:[%s405 + $0x4] sm:$0xf]
        %v408 = vld [vmem:[%s405 + $0x8] sm:$0xf]
        %v409 = vld [vmem:[%s405 + $0xc] sm:$0xf]
        %v410 = vld [vmem:[%s405 + $0x10] sm:$0xf]
        %v411 = vld [vmem:[%s405 + $0x14] sm:$0xf]
        %v412 = vld [vmem:[%s405 + $0x18] sm:$0xf]
        %v413 = vld [vmem:[%s405 + $0x1c] sm:$0xf]
        %v414 = vld [vmem:[%s405 + $0x20] sm:$0xf]
        %v415 = vld [vmem:[%s405 + $0x24] sm:$0xf]
        %v416 = vld [vmem:[%s405 + $0x28] sm:$0xf]
        %v417 = vld [vmem:[%s405 + $0x2c] sm:$0xf]
        %v418 = vld [vmem:[%s405 + $0x30] sm:$0xf]
        %v419 = vld [vmem:[%s405 + $0x34] sm:$0xf]
        %v420 = vld [vmem:[%s405 + $0x38] sm:$0xf]
        %v421 = vld [vmem:[%s405 + $0x3c] sm:$0xf]
        %v422 = vlaneseq
        %v423 = vshrl.u32 %v422, 7
        %v424 = vsub.s32 3, %v423
        %v425 = vrot.slane %v223, %v424
        %v442 = vunpack.c.l.b16 %v406
        %v443 = vunpack.c.l.b16 %v407
        %v444 = vunpack.c.l.b16 %v408
        %v445 = vunpack.c.l.b16 %v409
        %v446 = vunpack.c.l.b16 %v410
        %v447 = vunpack.c.l.b16 %v411
        %v448 = vunpack.c.l.b16 %v412
        %v449 = vunpack.c.l.b16 %v413
        %v450 = vunpack.c.l.b16 %v414
        %v451 = vunpack.c.l.b16 %v415
        %v452 = vunpack.c.l.b16 %v416
        %v453 = vunpack.c.l.b16 %v417
        %v454 = vunpack.c.l.b16 %v418
        %v455 = vunpack.c.l.b16 %v419
        %v456 = vunpack.c.l.b16 %v420
        %v457 = vunpack.c.l.b16 %v421
        %v458 = vpack.c.b16 %v443, %v442
        %v459 = vpack.c.b16 %v445, %v444
        %v460 = vpack.c.b16 %v447, %v446
        %v461 = vpack.c.b16 %v449, %v448
        %v462 = vpack.c.b16 %v451, %v450
        %v463 = vpack.c.b16 %v453, %v452
        %v464 = vpack.c.b16 %v455, %v454
        %v465 = vpack.c.b16 %v457, %v456
        %474 = vmatprep.subr.bf16.mxu0 0
        %475 = vmatpush1.bf16.msra.mxu0 %v458
        %476 = vmatprep.subr.bf16.mxu0 0
        %477 = vmatpush1.bf16.msra.mxu0 %v459
        %478 = vmatprep.subr.bf16.mxu0 0
        %479 = vmatpush1.bf16.msra.mxu0 %v460
        %480 = vmatprep.subr.bf16.mxu0 0
        %481 = vmatpush1.bf16.msra.mxu0 %v461
        %482 = vmatprep.subr.bf16.mxu0 0
        %483 = vmatpush1.bf16.msra.mxu0 %v462
        %484 = vmatprep.subr.bf16.mxu0 0
        %485 = vmatpush1.bf16.msra.mxu0 %v463
        %486 = vmatprep.subr.bf16.mxu0 0
        %487 = vmatpush1.bf16.msra.mxu0 %v464
        %488 = vmatprep.subr.bf16.mxu0 0
        %489 = vmatpush1.bf16.msra.mxu0 %v465
        %490 = vmatprep.subr.bf16.mxu0 0
        %491 = vmatpush1.bf16.msra.mxu0 0
        %492 = vmatprep.subr.bf16.mxu0 0
        %493 = vmatpush1.bf16.msra.mxu0 0
        %494 = vmatprep.subr.bf16.mxu0 0
        %495 = vmatpush1.bf16.msra.mxu0 0
        %496 = vmatprep.subr.bf16.mxu0 0
        %497 = vmatpush1.bf16.msra.mxu0 0
        %498 = vmatprep.subr.bf16.mxu0 0
        %499 = vmatpush1.bf16.msra.mxu0 0
        %500 = vmatprep.subr.bf16.mxu0 0
        %501 = vmatpush1.bf16.msra.mxu0 0
        %502 = vmatprep.subr.bf16.mxu0 0
        %503 = vmatpush1.bf16.msra.mxu0 0
        %504 = vmatprep.subr.bf16.mxu0 0
        %505 = vmatpush1.bf16.msra.mxu0 0
        %506 = vmatprep.mubr.bf16.mxu0 0
        %507 = vmatmul.mubr.bf16.gmra.mrb[0].mxu0 %v403
        %v508 = vpop.f32.mrb[0].mxu0
        %v509 = vadd.f32 %v425, %v508
        %v510 = vpop.f32.mrb[0].mxu0
        %v511 = vpop.f32.mrb[0].mxu0
        %v512 = vadd.f32 %v425, %v511
        %v513 = vpop.f32.mrb[0].mxu0
        %514 = vmatprep.mubr.bf16.mxu0 0
        %515 = vmatmul.mubr.bf16.gmra.mrb[0].mxu0 %v404
        %v516 = vpop.f32.mrb[0].mxu0
        %v517 = vadd.f32 %v425, %v516
        %v518 = vpop.f32.mrb[0].mxu0
        %v519 = vpop.f32.mrb[0].mxu0
        %v520 = vadd.f32 %v425, %v519
        %v521 = vpop.f32.mrb[0].mxu0
        %522 = vdwg.mxu0
        %523 = vadd.xlane.f32.xlu0 %v509
        %v524 = vpop.xlane.xlu0 %523
        %525 = vadd.xlane.f32.xlu0 %v512
        %v526 = vpop.xlane.xlu0 %525
        %527 = vadd.xlane.f32.xlu0 %v517
        %v528 = vpop.xlane.xlu0 %527
        %529 = vadd.xlane.f32.xlu0 %v520
        %v530 = vpop.xlane.xlu0 %529
        %v531 = vmul.f32 %v524, 0.0078125
        %v532 = vmul.f32 %v526, 0.0078125
        %v533 = vmul.f32 %v528, 0.0078125
        %v534 = vmul.f32 %v530, 0.0078125
        %v535 = vsub.f32 %v509, %v531
        %v536 = vsub.f32 %v512, %v532
        %v537 = vsub.f32 %v517, %v533
        %v538 = vsub.f32 %v520, %v534
        %v539 = vmul.f32 %v535, %v535
        %v540 = vmul.f32 %v536, %v536
        %v541 = vmul.f32 %v537, %v537
        %v542 = vmul.f32 %v538, %v538
        %543 = vadd.xlane.f32.xlu0 %v539
        %v544 = vpop.xlane.xlu0 %543
        %545 = vadd.xlane.f32.xlu0 %v540
        %v546 = vpop.xlane.xlu0 %545
        %547 = vadd.xlane.f32.xlu0 %v541
        %v548 = vpop.xlane.xlu0 %547
        %549 = vadd.xlane.f32.xlu0 %v542
        %v550 = vpop.xlane.xlu0 %549
        %v551 = vmul.f32 %v544, 0.0078125
        %v552 = vmul.f32 %v546, 0.0078125
        %v553 = vmul.f32 %v548, 0.0078125
        %v554 = vmul.f32 %v550, 0.0078125
        %v555 = vadd.f32 %v551, 1e-05
        %v556 = vadd.f32 %v552, 1e-05
        %v557 = vadd.f32 %v553, 1e-05
        %v558 = vadd.f32 %v554, 1e-05
        %v559 = vrsqrt.pop %v555
        %v560 = vrsqrt.pop %v556
        %v561 = vrsqrt.pop %v557
        %v562 = vrsqrt.pop %v558
        %v563 = vlaneseq
        %v564 = vshrl.u32 %v563, 7
        %v565 = vsub.s32 4, %v564
        %v566 = vrot.slane %v223, %v565
        %v567 = vmul.f32 %v559, %v566
        %v568 = vmul.f32 %v560, %v566
        %v569 = vmul.f32 %v561, %v566
        %v570 = vmul.f32 %v562, %v566
        %v571 = vmul.f32 %v535, %v567
        %v572 = vmul.f32 %v536, %v568
        %v573 = vmul.f32 %v537, %v569
        %v574 = vmul.f32 %v538, %v570
        %v575 = vlaneseq
        %v576 = vshrl.u32 %v575, 7
        %v577 = vsub.s32 5, %v576
        %v578 = vrot.slane %v223, %v577
        %v579 = vadd.f32 %v571, %v578
        %v580 = vadd.f32 %v572, %v578
        %v581 = vadd.f32 %v573, %v578
        %v582 = vadd.f32 %v574, %v578
        %v583 = vadd.f32 %v219, %v579
        %v584 = vadd.f32 %v220, %v580
        %v585 = vadd.f32 %v221, %v581
        %v586 = vadd.f32 %v222, %v582
        %587 = vst [vmem:[%s215] sm:$0xff] %v583
        %588 = vst [vmem:[%s215 + $0x8] sm:$0xff] %v584
        %589 = vst [vmem:[%s215 + $0x10] sm:$0xff] %v585
        %590 = vst [vmem:[%s215 + $0x18] sm:$0xff] %v586
        %s591 = sand.u32 %s97, 1
        %s592 = scalar_lea.sflag [#allocation4], %s591
        %s593 = sand.u32 %s97, 1
        %s594 = smul.addr %s593, 32
        %s595 = scalar_lea.vmem [#allocation8], %s594
        // Predicated region
        $region45: #{tpu_custom_call.1} parent=31 // pred_check
          %p596 = pneg %p107
        $region46: #{tpu_custom_call.1} parent=31 // pred_check_branch
          %598 = sbr.rel (%p596) target = $region48
        $region47: #{tpu_custom_call.1} parent=31 // pred_region
          %s599 = smul.u32 4, %s21
          %s601 = ssub.s32 512, 512
          %602 = vsyncadd %s592, %s601
          %s603 = smul.addr %s599, 128
          %s604 = scalar_lea.hbm %s3, %s603
          %s605 = sshll.u32 %s595, 4
          %s606 = int_to_ptr.vmem [resolvable:$true] %s605
          %611 = dma.vmem_to_hbm [thread:$0]  %s606, 512, %s604, %s592, 128, 128, 8
        $region48: #{tpu_custom_call.1} parent=31 // pred_fallthru
          _
      $region32: #{tpu_custom_call.1} parent=5 // pred_fallthru
        _
      %p612 = scmp.le.s32.totalorder 2, %s16
      // Predicated region
      $region49: #{tpu_custom_call.1} parent=5 // pred_check
        %p613 = pneg %p612
      $region50: #{tpu_custom_call.1} parent=5 // pred_check_branch
        %615 = sbr.rel (%p613) target = $region52
      $region51: #{tpu_custom_call.1} parent=5 // pred_region
        %s616 = ssub.s32 %s16, 2
        // Predicated region
        $region53: #{tpu_custom_call.1} parent=51 // pred_check
          %p617 = pneg %p113
        $region54: #{tpu_custom_call.1} parent=51 // pred_check_branch
          %619 = sbr.rel (%p617) target = $region56
        $region55: #{tpu_custom_call.1} parent=51 // pred_region
          %s620 = sand.u32 %s98, 1
          %s621 = scalar_lea.sflag [#allocation4], %s620
          %s622 = sand.u32 %s98, 1
          %s623 = smul.addr %s622, 32
          %s624 = scalar_lea.vmem [#allocation8], %s623
          %625 = dma.done %s621, 512
        $region56: #{tpu_custom_call.1} parent=51 // pred_fallthru
          _
      $region52: #{tpu_custom_call.1} parent=5 // pred_fallthru
        _
    $region6: #{tpu_custom_call.1} parent=1 // loop_footer
      %s20 = sadd.s32 1, %s16
    $region7: #{tpu_custom_call.1} parent=1 // loop_footer_branch
      %15 = sbr.rel target = $region3
    $region8: #{tpu_custom_call.1} parent=1 // loop_exit
      _
    %626 = vsyncpa [#allocation3], 1
    %s627 = scalar_lea.sflag [#allocation3], 1
    %628 = vsyncpa %s627, 1
    %629 = vsyncpa [#allocation6], 1
    %630 = vsyncpa [#allocation4], 1
    %s631 = scalar_lea.sflag [#allocation4], 1
    %632 = vsyncpa %s631, 1

</llo_original>
